<compile_context>
chip_gen: v5e
topology: v5e:2x2
jax: 0.10.0
libtpu: 0.0.40
codegen_flags: <defaults>
</compile_context>

<pallas_src>
import functools

import jax
import jax.numpy as jnp
import numpy as np
from jax.experimental import pallas as pl
from jax.experimental.pallas import tpu as pltpu


# --------------------------------------------------------------------------
# helpers
# --------------------------------------------------------------------------
def _gelu_tanh(x):
    c = float(np.sqrt(2.0 / np.pi))
    return 0.5 * x * (1.0 + jnp.tanh(c * (x + 0.044715 * x * x * x)))


def _device_kind():
    try:
        return jax.devices()[0].device_kind.lower()
    except Exception:  # pragma: no cover
        return ""


def _default_tiles(kind):
    """(row_tile, vocab_tile) defaults per TPU generation."""
    if "v5" in kind:
        return 256, 256          # slower MXU -> crossover at small tm
    if "v7" in kind:
        return 512, 512          # 64 MiB VMEM -> keep tiles moderate
    if "v6" in kind:
        return 1024, 512         # 128 MiB VMEM, fast MXU
    return 512, 512              # safe default


def _vmem_cap_bytes(kind):
    if "v7" in kind:
        return 48 * 1024 * 1024  # leave headroom below the 64 MiB physical VMEM
    return 100 * 1024 * 1024     # v5e / v6e have 128 MiB physical


def _vmem_limit(need_bytes, kind):
    return int(min(max(need_bytes * 5 // 4 + (2 << 20), 16 << 20),
                   _vmem_cap_bytes(kind)))


# --------------------------------------------------------------------------
# kernels
# --------------------------------------------------------------------------
def _transform_kernel(x_ref, wd_ref, consts_ref, h_ref, *, eps):
    """dense -> GELU -> LayerNorm for one row tile.

    x_ref     : (tm, H) input rows (compute dtype)
    wd_ref    : (H, H)  dense weight, pre-transposed to x @ W layout
    consts_ref: (3, H)  f32 [dense bias; LN gamma; LN beta]
    h_ref     : (tm, H) transformed hidden states (compute dtype)
    """
    h = jnp.dot(x_ref[...], wd_ref[...], preferred_element_type=jnp.float32)
    h = h + consts_ref[0:1, :]
    h = _gelu_tanh(h)
    mu = jnp.mean(h, axis=-1, keepdims=True)
    var = jnp.mean(jnp.square(h - mu), axis=-1, keepdims=True)
    hn = (h - mu) * jax.lax.rsqrt(var + eps)
    h_ref[...] = (hn * consts_ref[1:2, :] + consts_ref[2:3, :]).astype(h_ref.dtype)


def _decoder_kernel(h_ref, wv_ref, bv_ref, out_ref):
    """logits tile = h @ Wdec_tile + b_tile  (lane-dense store).

    h_ref  : (tm, H)   transformed hidden states
    wv_ref : (H, tn)   decoder weight tile, pre-transposed to x @ W layout
    bv_ref : (1, tn)   f32 decoder bias tile
    out_ref: (tm, tn)  logits tile
    """
    out_ref[...] = (jnp.dot(h_ref[...], wv_ref[...],
                            preferred_element_type=jnp.float32)
                    + bv_ref[...]).astype(out_ref.dtype)


# --------------------------------------------------------------------------
# host-side parameter preparation (done ONCE, outside the per-call path)
# --------------------------------------------------------------------------
def prepare_lm_head_params(params, *, compute_dtype=jnp.bfloat16, vocab_tile=None):
    kind = _device_kind()
    if vocab_tile is None:
        _, vocab_tile = _default_tiles(kind)

    H = params["w_dense"].shape[0]
    V = params["b_dec"].shape[0]

    tn = min(int(vocab_tile), V)
    Vp = -(-V // tn) * tn

    wd_t = jnp.asarray(params["w_dense"], compute_dtype).T        # (H, H)
    wv_t = jnp.asarray(params["w_decoder"], compute_dtype).T      # (H, V)
    bv = jnp.asarray(params["b_dec"], jnp.float32).reshape(1, V)
    if Vp != V:
        wv_t = jnp.pad(wv_t, ((0, 0), (0, Vp - V)))
        bv = jnp.pad(bv, ((0, 0), (0, Vp - V)))

    consts = jnp.stack([
        jnp.asarray(params["b_dense"], jnp.float32),
        jnp.asarray(params["ln_gamma"], jnp.float32),
        jnp.asarray(params["ln_beta"], jnp.float32),
    ])                                                            # (3, H)

    return {
        "wd_t": wd_t, "consts": consts, "wv_t": wv_t, "bv": bv,
        "H": H, "V": V, "Vp": Vp, "tn": tn,
        "compute_dtype": jnp.dtype(compute_dtype),
    }


# --------------------------------------------------------------------------
# forward pass
# --------------------------------------------------------------------------
def deberta_lm_head(hidden_states, prepared, *, eps=1e-7, row_tile=None):
    """hidden_states: (B, S, H).  Returns logits (B, S, V)."""
    kind = _device_kind()
    if row_tile is None:
        row_tile, _ = _default_tiles(kind)

    B, S, H = hidden_states.shape
    assert H == prepared["H"]
    V, Vp, tn = prepared["V"], prepared["Vp"], prepared["tn"]
    cd = prepared["compute_dtype"]
    out_dtype = hidden_states.dtype

    R = B * S
    tm = min(int(row_tile), ((R + 7) // 8) * 8)
    Rp = -(-R // tm) * tm

    x = hidden_states.reshape(R, H).astype(cd)
    if Rp != R:
        x = jnp.pad(x, ((0, Rp - R), (0, 0)))

    cdb = jnp.dtype(cd).itemsize
    odb = jnp.dtype(out_dtype).itemsize

    # ---- kernel 1: dense + GELU + LayerNorm ------------------------------
    vmem_t = (2 * tm * H * cdb          # x tile (double-buffered)
              + 2 * H * H * cdb         # dense weight
              + 2 * 8 * H * 4           # (3,H) consts, sublane-padded
              + 2 * tm * H * cdb)       # h output tile
    h = pl.pallas_call(
        functools.partial(_transform_kernel, eps=float(eps)),
        out_shape=jax.ShapeDtypeStruct((Rp, H), cd),
        grid_spec=pltpu.PrefetchScalarGridSpec(
            num_scalar_prefetch=0,
            grid=(Rp // tm,),
            in_specs=[
                pl.BlockSpec((tm, H), lambda i: (i, 0)),   # x rows
                pl.BlockSpec((H, H), lambda i: (0, 0)),    # dense weight (pre-T)
                pl.BlockSpec((3, H), lambda i: (0, 0)),    # bias / gamma / beta
            ],
            out_specs=pl.BlockSpec((tm, H), lambda i: (i, 0)),
        ),
        compiler_params=pltpu.CompilerParams(
            dimension_semantics=("parallel",),
            vmem_limit_bytes=_vmem_limit(vmem_t, kind),
        ),
    )(x, prepared["wd_t"], prepared["consts"])

    # ---- kernel 2: decoder projection (hidden -> vocab) ------------------
    vmem_d = (2 * tm * H * cdb          # h tile
              + 2 * H * tn * cdb        # decoder weight tile
              + 2 * 8 * tn * 4          # bias tile, sublane-padded
              + 2 * tm * tn * odb)      # logits tile
    out = pl.pallas_call(
        _decoder_kernel,
        out_shape=jax.ShapeDtypeStruct((Rp, Vp), out_dtype),
        grid_spec=pltpu.PrefetchScalarGridSpec(
            num_scalar_prefetch=0,
            grid=(Rp // tm, Vp // tn),
            in_specs=[
                pl.BlockSpec((tm, H), lambda i, j: (i, 0)),   # h rows
                pl.BlockSpec((H, tn), lambda i, j: (0, j)),   # decoder weight tile
                pl.BlockSpec((1, tn), lambda i, j: (0, j)),   # decoder bias tile
            ],
            out_specs=pl.BlockSpec((tm, tn), lambda i, j: (i, j)),
        ),
        compiler_params=pltpu.CompilerParams(
            dimension_semantics=("parallel", "parallel"),
            vmem_limit_bytes=_vmem_limit(vmem_d, kind),
        ),
    )(h, prepared["wv_t"], prepared["bv"])

    return out[:R, :V].reshape(B, S, V)


# --------------------------------------------------------------------------
# pure-JAX reference + params
# --------------------------------------------------------------------------
def deberta_lm_head_reference(hidden_states, params, *, eps=1e-7):
    h = jnp.matmul(hidden_states, params["w_dense"].T) + params["b_dense"]
    h = _gelu_tanh(h)
    mu = jnp.mean(h, axis=-1, keepdims=True)
    var = jnp.mean(jnp.square(h - mu), axis=-1, keepdims=True)
    h = (h - mu) / jnp.sqrt(var + eps)
    h = h * params["ln_gamma"] + params["ln_beta"]
    return jnp.matmul(h, params["w_decoder"].T) + params["b_dec"]


def init_params(key, hidden_size, vocab_size):
    k1, k2, k3, k4, k5, k6 = jax.random.split(key, 6)
    std = 0.02
    return {
        "w_dense": std * jax.random.normal(k1, (hidden_size, hidden_size), jnp.float32),
        "b_dense": std * jax.random.normal(k2, (hidden_size,), jnp.float32),
        "ln_gamma": 1.0 + 0.1 * jax.random.normal(k3, (hidden_size,), jnp.float32),
        "ln_beta": 0.1 * jax.random.normal(k4, (hidden_size,), jnp.float32),
        "w_decoder": std * jax.random.normal(k5, (vocab_size, hidden_size), jnp.float32),
        "b_dec": 0.02 * jax.random.normal(k6, (vocab_size,), jnp.float32),
    }


if __name__ == "__main__":
    # Small, lane/sublane-friendly demo shapes.
    B, S, H, V = 2, 16, 128, 512
    EPS = 1e-7  # DeBERTa-v2 layer_norm_eps default

    key = jax.random.PRNGKey(0)
    kx, kp = jax.random.split(key)

    hidden_states = jax.random.normal(kx, (B, S, H), dtype=jnp.float32)
    params = init_params(kp, H, V)

    ref = jax.block_until_ready(
        deberta_lm_head_reference(hidden_states, params, eps=EPS))

    # f32 compute path: tight tolerance check.
    prep_f32 = prepare_lm_head_params(params, compute_dtype=jnp.float32)
    out_f32 = jax.block_until_ready(
        deberta_lm_head(hidden_states, prep_f32, eps=EPS))
    assert out_f32.shape == (B, S, V)
    np.testing.assert_allclose(np.asarray(out_f32), np.asarray(ref),
                               rtol=1e-4, atol=1e-4)

    # bf16 fast path (production config): looser tolerance.
    prep_bf16 = prepare_lm_head_params(params, compute_dtype=jnp.bfloat16)
    out_bf16 = jax.block_until_ready(
        deberta_lm_head(hidden_states, prep_bf16, eps=EPS))
    assert out_bf16.shape == (B, S, V)
    np.testing.assert_allclose(np.asarray(out_bf16), np.asarray(ref),
                               rtol=5e-2, atol=3e-2)

    print("KERNEL_OK")
</pallas_src>

<mosaic_0001>
module attributes {stable_mosaic.version = 11 : i64} {
  func.func @_transform_kernel(%arg0: i32, %arg1: memref<32x128xf32, #tpu.memory_space<vmem>>, %arg2: memref<128x128xf32, #tpu.memory_space<vmem>>, %arg3: memref<3x128xf32, #tpu.memory_space<vmem>>, %arg4: memref<32x128xf32, #tpu.memory_space<vmem>>) attributes {dimension_semantics = [#tpu.dimension_semantics<parallel>], iteration_bounds = array<i64: 1>, scalar_prefetch = 0 : i64, scratch_operands = 0 : i64, tpu.core_type = #tpu.core_type<tc>, window_params = [{transform_indices = @transform_0, window_bounds = array<i64: 32, 128>}, {pipeline_mode = #tpu.pipeline_mode<synchronous>, transform_indices = @transform_1, window_bounds = array<i64: 128, 128>}, {pipeline_mode = #tpu.pipeline_mode<synchronous>, transform_indices = @transform_2, window_bounds = array<i64: 3, 128>}, {transform_indices = @transform_3, window_bounds = array<i64: 32, 128>}]} {
    %c0 = arith.constant 0 : index
    %c0_0 = arith.constant 0 : index
    %0 = vector.load %arg1[%c0, %c0_0] : memref<32x128xf32, #tpu.memory_space<vmem>>, vector<32x128xf32>
    %c0_1 = arith.constant 0 : index
    %c0_2 = arith.constant 0 : index
    %1 = vector.load %arg2[%c0_1, %c0_2] : memref<128x128xf32, #tpu.memory_space<vmem>>, vector<128x128xf32>
    %cst = arith.constant dense<0.000000e+00> : vector<32x128xf32>
    %2 = tpu.matmul %0, %1, %cst {dimension_numbers = #tpu.dot_dimension_numbers<[1], [0], [0], [1], [0, 0, 1, 1], [], []>} : vector<32x128xf32>, vector<128x128xf32>, vector<32x128xf32> -> vector<32x128xf32>
    %c0_3 = arith.constant 0 : index
    %c0_4 = arith.constant 0 : index
    %3 = vector.load %arg3[%c0_3, %c0_4] : memref<3x128xf32, #tpu.memory_space<vmem>>, vector<1x128xf32>
    %4 = vector.broadcast %3 : vector<1x128xf32> to vector<32x128xf32>
    %5 = arith.addf %2, %4 : vector<32x128xf32>
    %cst_5 = arith.constant 5.000000e-01 : f32
    %6 = vector.broadcast %cst_5 : f32 to vector<32x128xf32>
    %7 = arith.mulf %6, %5 : vector<32x128xf32>
    %cst_6 = arith.constant 4.471500e-02 : f32
    %8 = vector.broadcast %cst_6 : f32 to vector<32x128xf32>
    %9 = arith.mulf %8, %5 : vector<32x128xf32>
    %10 = arith.mulf %9, %5 : vector<32x128xf32>
    %11 = arith.mulf %10, %5 : vector<32x128xf32>
    %12 = arith.addf %5, %11 : vector<32x128xf32>
    %cst_7 = arith.constant 0.797884583 : f32
    %13 = vector.broadcast %cst_7 : f32 to vector<32x128xf32>
    %14 = arith.mulf %13, %12 : vector<32x128xf32>
    %15 = math.tanh %14 : vector<32x128xf32>
    %cst_8 = arith.constant 1.000000e+00 : f32
    %16 = vector.broadcast %cst_8 : f32 to vector<32x128xf32>
    %17 = arith.addf %16, %15 : vector<32x128xf32>
    %18 = arith.mulf %7, %17 : vector<32x128xf32>
    %cst_9 = arith.constant dense<0.000000e+00> : vector<32xf32>
    %19 = vector.multi_reduction <add>, %18, %cst_9 [1] : vector<32x128xf32> to vector<32xf32>
    %20 = vector.shape_cast %19 : vector<32xf32> to vector<32x1xf32>
    %cst_10 = arith.constant 1.280000e+02 : f32
    %21 = vector.broadcast %cst_10 : f32 to vector<32x1xf32>
    %22 = arith.divf %20, %21 : vector<32x1xf32>
    %23 = vector.broadcast %22 : vector<32x1xf32> to vector<32x128xf32>
    %24 = arith.subf %18, %23 : vector<32x128xf32>
    %25 = arith.mulf %24, %24 : vector<32x128xf32>
    %cst_11 = arith.constant dense<0.000000e+00> : vector<32xf32>
    %26 = vector.multi_reduction <add>, %25, %cst_11 [1] : vector<32x128xf32> to vector<32xf32>
    %27 = vector.shape_cast %26 : vector<32xf32> to vector<32x1xf32>
    %cst_12 = arith.constant 1.280000e+02 : f32
    %28 = vector.broadcast %cst_12 : f32 to vector<32x1xf32>
    %29 = arith.divf %27, %28 : vector<32x1xf32>
    %30 = vector.broadcast %22 : vector<32x1xf32> to vector<32x128xf32>
    %31 = arith.subf %18, %30 : vector<32x128xf32>
    %cst_13 = arith.constant 1.000000e-07 : f32
    %32 = vector.broadcast %cst_13 : f32 to vector<32x1xf32>
    %33 = arith.addf %29, %32 : vector<32x1xf32>
    %34 = math.rsqrt %33 : vector<32x1xf32>
    %35 = vector.broadcast %34 : vector<32x1xf32> to vector<32x128xf32>
    %36 = arith.mulf %31, %35 : vector<32x128xf32>
    %c1 = arith.constant 1 : index
    %c0_14 = arith.constant 0 : index
    %37 = vector.load %arg3[%c1, %c0_14] : memref<3x128xf32, #tpu.memory_space<vmem>>, vector<1x128xf32>
    %38 = vector.broadcast %37 : vector<1x128xf32> to vector<32x128xf32>
    %39 = arith.mulf %36, %38 : vector<32x128xf32>
    %c2 = arith.constant 2 : index
    %c0_15 = arith.constant 0 : index
    %40 = vector.load %arg3[%c2, %c0_15] : memref<3x128xf32, #tpu.memory_space<vmem>>, vector<1x128xf32>
    %41 = vector.broadcast %40 : vector<1x128xf32> to vector<32x128xf32>
    %42 = arith.addf %39, %41 : vector<32x128xf32>
    %c0_16 = arith.constant 0 : index
    %c0_17 = arith.constant 0 : index
    %43 = vector.load %arg4[%c0_16, %c0_17] : memref<32x128xf32, #tpu.memory_space<vmem>>, vector<32x128xf32>
    tpu.vector_store %arg4[%c0_16, %c0_17], %42 {strides = array<i32>} : memref<32x128xf32, #tpu.memory_space<vmem>>, vector<32x128xf32>,
    return
  }
  func.func @transform_0(%arg0: i32) -> (i32, i32) {
    %c0_i32 = arith.constant 0 : i32
    %c0_i32_0 = arith.constant 0 : i32
    return %arg0, %c0_i32 : i32, i32
  }
  func.func @transform_1(%arg0: i32) -> (i32, i32) {
    %c0_i32 = arith.constant 0 : i32
    %c0_i32_0 = arith.constant 0 : i32
    %c0_i32_1 = arith.constant 0 : i32
    return %c0_i32, %c0_i32_0 : i32, i32
  }
  func.func @transform_2(%arg0: i32) -> (i32, i32) {
    %c0_i32 = arith.constant 0 : i32
    %c0_i32_0 = arith.constant 0 : i32
    %c0_i32_1 = arith.constant 0 : i32
    return %c0_i32, %c0_i32_0 : i32, i32
  }
  func.func @transform_3(%arg0: i32) -> (i32, i32) {
    %c0_i32 = arith.constant 0 : i32
    %c0_i32_0 = arith.constant 0 : i32
    return %arg0, %c0_i32 : i32, i32
  }
}

</mosaic_0001>

<llo_original>
// kernel: tpu_custom_call.1
$region0: #{tpu_custom_call.1}
  #allocation0 [shape = 'u32[]', space=smem, size = 0x4, offset = 0x4, fixed_abs, tag = 'smem constant byte address 0x4 - core index']
  #allocation1 [shape = 'u32[72,128]{1,0:T(1,128)}', space=vmem, size = 0x9000, scoped, tag = 'internal scratch']
  %s0 = inlined_call_operand.hbm [shape: f32[32,128], index: 0, kind: input, shape index: {}]
  %s1 = inlined_call_operand.hbm [shape: f32[128,128], index: 1, kind: input, shape index: {}]
  %s2 = inlined_call_operand.hbm [shape: f32[3,128], index: 2, kind: input, shape index: {}]
  %s3 = inlined_call_operand.hbm [shape: f32[32,128], index: 3, kind: output, shape index: {}]
  %s4 = sld [smem:[#allocation0]]
  $region34: #{tpu_custom_call.1} parent=0
    _
  %s6 = ssub.s32 1, %s4
  %s7 = scalar_select 0, %s6, %s4
  $region1: #{tpu_custom_call.1} parent=0
    #allocation2 [shape = 'u8[16384]{0}', space=vmem, size = 0x4000, scoped, tag = 'input window, operand 0, single buffered']
    #allocation3 [shape = 's32[1]{0}', space=sflag, size = 0x4, scoped, tag = 'scoped memory for tpu_custom_call.1']
    #allocation4 [shape = 's32[1]{0}', space=sflag, size = 0x4, scoped, tag = 'scoped memory for tpu_custom_call.1']
    #allocation5 [shape = 'u8[65536]{0}', space=vmem, size = 0x10000, scoped, tag = 'input window, operand 1, single buffered']
    #allocation6 [shape = 's32[1]{0}', space=sflag, size = 0x4, scoped, tag = 'scoped memory for tpu_custom_call.1']
    #allocation7 [shape = 'u8[2048]{0}', space=vmem, size = 0x800, scoped, tag = 'input window, operand 2, single buffered']
    #allocation8 [shape = 'u8[16384]{0}', space=vmem, size = 0x4000, scoped, tag = 'output window, operand 0, single buffered']
    %8 = vsyncpa [#allocation3], 0
    %9 = vsyncpa [#allocation6], 0
    %10 = vsyncpa [#allocation4], 0
    // Predicated region
    $region2: #{tpu_custom_call.1} parent=1 // pred_check
      _
    $region3: #{tpu_custom_call.1} parent=1 // pred_check_branch
      %12 = sbr.rel (0) target = $region5
    $region4: #{tpu_custom_call.1} parent=1 // pred_region
      %14 = vsyncadd [#allocation3], 0
      %s15 = sshll.u32 %s0, 4
      %s16 = int_to_ptr.hbm [resolvable:$true] %s15
      %s17 = sshll.u32 [#allocation2], 4
      %s18 = int_to_ptr.vmem [resolvable:$true] %s17
      %23 = dma.hbm_to_vmem [thread:$0]  %s16, 512, %s18, [#allocation3], 128, 128, 8
    $region5: #{tpu_custom_call.1} parent=1 // pred_fallthru
      _
    // Predicated region
    $region6: #{tpu_custom_call.1} parent=1 // pred_check
      _
    $region7: #{tpu_custom_call.1} parent=1 // pred_check_branch
      %25 = sbr.rel (0) target = $region9
    $region8: #{tpu_custom_call.1} parent=1 // pred_region
      %27 = vsyncadd [#allocation6], 0
      %s28 = sshll.u32 %s1, 4
      %s29 = int_to_ptr.hbm [resolvable:$true] %s28
      %s30 = sshll.u32 [#allocation5], 4
      %s31 = int_to_ptr.vmem [resolvable:$true] %s30
      %36 = dma.hbm_to_vmem [thread:$0]  %s29, 2048, %s31, [#allocation6], 128, 128, 8
    $region9: #{tpu_custom_call.1} parent=1 // pred_fallthru
      _
    // Predicated region
    $region10: #{tpu_custom_call.1} parent=1 // pred_check
      _
    $region11: #{tpu_custom_call.1} parent=1 // pred_check_branch
      %38 = sbr.rel (0) target = $region13
    $region12: #{tpu_custom_call.1} parent=1 // pred_region
      %40 = vsyncadd [#allocation6], 0
      %s42 = sshll.u32 %s2, 4
      %s43 = int_to_ptr.hbm [resolvable:$true] %s42
      %s44 = sshll.u32 [#allocation7], 4
      %s45 = int_to_ptr.vmem [resolvable:$true] %s44
      %47 = dma.hbm_to_vmem [thread:$0]  %s43, 64, %s45, [#allocation6]
    $region13: #{tpu_custom_call.1} parent=1 // pred_fallthru
      _
    // Predicated region
    $region14: #{tpu_custom_call.1} parent=1 // pred_check
      _
    $region15: #{tpu_custom_call.1} parent=1 // pred_check_branch
      %49 = sbr.rel (0) target = $region17
    $region16: #{tpu_custom_call.1} parent=1 // pred_region
      %51 = dma.done [#allocation3], 512
    $region17: #{tpu_custom_call.1} parent=1 // pred_fallthru
      _
    // Predicated region
    $region18: #{tpu_custom_call.1} parent=1 // pred_check
      _
    $region19: #{tpu_custom_call.1} parent=1 // pred_check_branch
      %53 = sbr.rel (0) target = $region21
    $region20: #{tpu_custom_call.1} parent=1 // pred_region
      %55 = dma.done [#allocation6], 2048
    $region21: #{tpu_custom_call.1} parent=1 // pred_fallthru
      _
    // Predicated region
    $region22: #{tpu_custom_call.1} parent=1 // pred_check
      _
    $region23: #{tpu_custom_call.1} parent=1 // pred_check_branch
      %57 = sbr.rel (0) target = $region25
    $region24: #{tpu_custom_call.1} parent=1 // pred_region
      %59 = dma.done [#allocation6], 64
    $region25: #{tpu_custom_call.1} parent=1 // pred_fallthru
      _
    %v60 = vld [vmem:[#allocation2] sm:$0xff]
    %v61 = vld [vmem:[#allocation2 + $0x8] sm:$0xff]
    %v62 = vld [vmem:[#allocation2 + $0x10] sm:$0xff]
    %v63 = vld [vmem:[#allocation2 + $0x18] sm:$0xff]
    %v64 = vld [vmem:[#allocation5] sm:$0xff]
    %v65 = vld [vmem:[#allocation5 + $0x8] sm:$0xff]
    %v66 = vld [vmem:[#allocation5 + $0x10] sm:$0xff]
    %v67 = vld [vmem:[#allocation5 + $0x18] sm:$0xff]
    %v68 = vld [vmem:[#allocation5 + $0x20] sm:$0xff]
    %v69 = vld [vmem:[#allocation5 + $0x28] sm:$0xff]
    %v70 = vld [vmem:[#allocation5 + $0x30] sm:$0xff]
    %v71 = vld [vmem:[#allocation5 + $0x38] sm:$0xff]
    %v72 = vld [vmem:[#allocation5 + $0x40] sm:$0xff]
    %v73 = vld [vmem:[#allocation5 + $0x48] sm:$0xff]
    %v74 = vld [vmem:[#allocation5 + $0x50] sm:$0xff]
    %v75 = vld [vmem:[#allocation5 + $0x58] sm:$0xff]
    %v76 = vld [vmem:[#allocation5 + $0x60] sm:$0xff]
    %v77 = vld [vmem:[#allocation5 + $0x68] sm:$0xff]
    %v78 = vld [vmem:[#allocation5 + $0x70] sm:$0xff]
    %v79 = vld [vmem:[#allocation5 + $0x78] sm:$0xff]
    %v80 = vld [vmem:[#allocation7] sm:$0x1]
    %v81 = vperm.slane %v80, 0
    %82 = vmatpush.msra.mxu0 %v79
    %83 = vmatpush.msra.mxu0 %v78
    %84 = vmatpush.msra.mxu0 %v77
    %85 = vmatpush.msra.mxu0 %v76
    %86 = vmatpush.msra.mxu0 %v75
    %87 = vmatpush.msra.mxu0 %v74
    %88 = vmatpush.msra.mxu0 %v73
    %89 = vmatpush.msra.mxu0 %v72
    %90 = vmatpush.msra.mxu0 %v71
    %91 = vmatpush.msra.mxu0 %v70
    %92 = vmatpush.msra.mxu0 %v69
    %93 = vmatpush.msra.mxu0 %v68
    %94 = vmatpush.msra.mxu0 %v67
    %95 = vmatpush.msra.mxu0 %v66
    %96 = vmatpush.msra.mxu0 %v65
    %97 = vmatpush.msra.mxu0 %v64
    %98 = vmatmul.f32.gmra.mxu0 %v60
    %v99 = vpop.f32.mrf.mxu0
    %v100 = vadd.f32 %v81, %v99
    %101 = vmatmul.f32.gmra.mxu0 %v61
    %v102 = vpop.f32.mrf.mxu0
    %v103 = vadd.f32 %v81, %v102
    %104 = vmatmul.f32.gmra.mxu0 %v62
    %v105 = vpop.f32.mrf.mxu0
    %v106 = vadd.f32 %v81, %v105
    %107 = vmatmul.f32.gmra.mxu0 %v63
    %v108 = vpop.f32.mrf.mxu0
    %v109 = vadd.f32 %v81, %v108
    %110 = vdwg.mxu0
    %v111 = vmul.f32 %v100, 0.5
    %v112 = vmul.f32 %v103, 0.5
    %v113 = vmul.f32 %v106, 0.5
    %v114 = vmul.f32 %v109, 0.5
    %v115 = vmul.f32 %v100, 0.044715
    %v116 = vmul.f32 %v103, 0.044715
    %v117 = vmul.f32 %v106, 0.044715
    %v118 = vmul.f32 %v109, 0.044715
    %v119 = vmul.f32 %v115, %v100
    %v120 = vmul.f32 %v116, %v103
    %v121 = vmul.f32 %v117, %v106
    %v122 = vmul.f32 %v118, %v109
    %v123 = vmul.f32 %v119, %v100
    %v124 = vmul.f32 %v120, %v103
    %v125 = vmul.f32 %v121, %v106
    %v126 = vmul.f32 %v122, %v109
    %v127 = vadd.f32 %v100, %v123
    %v128 = vadd.f32 %v103, %v124
    %v129 = vadd.f32 %v106, %v125
    %v130 = vadd.f32 %v109, %v126
    %v131 = vmul.f32 %v127, 0.7978846
    %v132 = vmul.f32 %v128, 0.7978846
    %v133 = vmul.f32 %v129, 0.7978846
    %v134 = vmul.f32 %v130, 0.7978846
    %v135 = vtanh.pop %v131
    %v136 = vtanh.pop %v132
    %v137 = vtanh.pop %v133
    %v138 = vtanh.pop %v134
    %v139 = vadd.f32 %v135, 1.0
    %v140 = vadd.f32 %v136, 1.0
    %v141 = vadd.f32 %v137, 1.0
    %v142 = vadd.f32 %v138, 1.0
    %v143 = vmul.f32 %v111, %v139
    %v144 = vmul.f32 %v112, %v140
    %v145 = vmul.f32 %v113, %v141
    %v146 = vmul.f32 %v114, %v142
    %147 = vadd.xlane.f32.xlu0 %v143
    %v148 = vpop.xlane.xlu0 %147
    %149 = vadd.xlane.f32.xlu0 %v144
    %v150 = vpop.xlane.xlu0 %149
    %151 = vadd.xlane.f32.xlu0 %v145
    %v152 = vpop.xlane.xlu0 %151
    %153 = vadd.xlane.f32.xlu0 %v146
    %v154 = vpop.xlane.xlu0 %153
    %v155 = vrcp.pop 128.0
    %v156 = vmul.f32 128.0, %v155
    %v157 = vsub.f32 1.0, %v156
    %v158 = vmul.f32 %v155, %v157
    %v159 = vadd.f32 %v155, %v158
    %vm160 = vweird.f32 %v155
    %v161 = vsel %vm160, %v155, %v159
    %v162 = vmul.f32 %v148, %v161
    %v163 = vmul.f32 %v150, %v161
    %v164 = vmul.f32 %v152, %v161
    %v165 = vmul.f32 %v154, %v161
    %v166 = vsub.f32 %v143, %v162
    %v167 = vsub.f32 %v144, %v163
    %v168 = vsub.f32 %v145, %v164
    %v169 = vsub.f32 %v146, %v165
    %v170 = vmul.f32 %v166, %v166
    %v171 = vmul.f32 %v167, %v167
    %v172 = vmul.f32 %v168, %v168
    %v173 = vmul.f32 %v169, %v169
    %174 = vadd.xlane.f32.xlu0 %v170
    %v175 = vpop.xlane.xlu0 %174
    %176 = vadd.xlane.f32.xlu0 %v171
    %v177 = vpop.xlane.xlu0 %176
    %178 = vadd.xlane.f32.xlu0 %v172
    %v179 = vpop.xlane.xlu0 %178
    %180 = vadd.xlane.f32.xlu0 %v173
    %v181 = vpop.xlane.xlu0 %180
    %v182 = vmul.f32 %v175, %v161
    %v183 = vmul.f32 %v177, %v161
    %v184 = vmul.f32 %v179, %v161
    %v185 = vmul.f32 %v181, %v161
    %v186 = vadd.f32 %v182, 1e-07
    %v187 = vadd.f32 %v183, 1e-07
    %v188 = vadd.f32 %v184, 1e-07
    %v189 = vadd.f32 %v185, 1e-07
    %v190 = vrsqrt.pop %v186
    %v191 = vmul.f32 %v190, %v186
    %v192 = vmul.f32 %v191, %v190
    %v193 = vmul.f32 0.5, %v192
    %v194 = vsub.f32 1.5, %v193
    %v195 = vmul.f32 %v190, %v194
    %vm196 = vweird.f32 %v186
    %vm197 = vweird.f32 %v190
    %vm198 = vmor %vm196, %vm197
    %v199 = vsel %vm198, %v190, %v195
    %v200 = vrsqrt.pop %v187
    %v201 = vmul.f32 %v200, %v187
    %v202 = vmul.f32 %v201, %v200
    %v203 = vmul.f32 0.5, %v202
    %v204 = vsub.f32 1.5, %v203
    %v205 = vmul.f32 %v200, %v204
    %vm206 = vweird.f32 %v187
    %vm207 = vweird.f32 %v200
    %vm208 = vmor %vm206, %vm207
    %v209 = vsel %vm208, %v200, %v205
    %v210 = vrsqrt.pop %v188
    %v211 = vmul.f32 %v210, %v188
    %v212 = vmul.f32 %v211, %v210
    %v213 = vmul.f32 0.5, %v212
    %v214 = vsub.f32 1.5, %v213
    %v215 = vmul.f32 %v210, %v214
    %vm216 = vweird.f32 %v188
    %vm217 = vweird.f32 %v210
    %vm218 = vmor %vm216, %vm217
    %v219 = vsel %vm218, %v210, %v215
    %v220 = vrsqrt.pop %v189
    %v221 = vmul.f32 %v220, %v189
    %v222 = vmul.f32 %v221, %v220
    %v223 = vmul.f32 0.5, %v222
    %v224 = vsub.f32 1.5, %v223
    %v225 = vmul.f32 %v220, %v224
    %vm226 = vweird.f32 %v189
    %vm227 = vweird.f32 %v220
    %vm228 = vmor %vm226, %vm227
    %v229 = vsel %vm228, %v220, %v225
    %v230 = vmul.f32 %v166, %v199
    %v231 = vmul.f32 %v167, %v209
    %v232 = vmul.f32 %v168, %v219
    %v233 = vmul.f32 %v169, %v229
    %v234 = vld [vmem:[#allocation7 + $0x1] sm:$0x1]
    %v235 = vperm.slane %v234, 0
    %v236 = vmul.f32 %v230, %v235
    %v237 = vmul.f32 %v231, %v235
    %v238 = vmul.f32 %v232, %v235
    %v239 = vmul.f32 %v233, %v235
    %v240 = vld [vmem:[#allocation7 + $0x2] sm:$0x1]
    %v241 = vperm.slane %v240, 0
    %v242 = vadd.f32 %v236, %v241
    %v243 = vadd.f32 %v237, %v241
    %v244 = vadd.f32 %v238, %v241
    %v245 = vadd.f32 %v239, %v241
    %246 = vst [vmem:[#allocation8] sm:$0xff] %v242
    %247 = vst [vmem:[#allocation8 + $0x8] sm:$0xff] %v243
    %248 = vst [vmem:[#allocation8 + $0x10] sm:$0xff] %v244
    %249 = vst [vmem:[#allocation8 + $0x18] sm:$0xff] %v245
    // Predicated region
    $region26: #{tpu_custom_call.1} parent=1 // pred_check
      _
    $region27: #{tpu_custom_call.1} parent=1 // pred_check_branch
      %251 = sbr.rel (0) target = $region29
    $region28: #{tpu_custom_call.1} parent=1 // pred_region
      %253 = vsyncadd [#allocation4], 0
      %s254 = sshll.u32 [#allocation8], 4
      %s255 = int_to_ptr.vmem [resolvable:$true] %s254
      %s256 = sshll.u32 %s3, 4
      %s257 = int_to_ptr.hbm [resolvable:$true] %s256
      %262 = dma.vmem_to_hbm [thread:$0]  %s255, 512, %s257, [#allocation4], 128, 128, 8
    $region29: #{tpu_custom_call.1} parent=1 // pred_fallthru
      _
    // Predicated region
    $region30: #{tpu_custom_call.1} parent=1 // pred_check
      _
    $region31: #{tpu_custom_call.1} parent=1 // pred_check_branch
      %264 = sbr.rel (0) target = $region33
    $region32: #{tpu_custom_call.1} parent=1 // pred_region
      %266 = dma.done [#allocation4], 512
    $region33: #{tpu_custom_call.1} parent=1 // pred_fallthru
      _
    %267 = vsyncpa [#allocation3], 1
    %268 = vsyncpa [#allocation6], 1
    %269 = vsyncpa [#allocation4], 1

</llo_original>
